<compile_context>
chip_gen: v5e
topology: v5e:2x2
jax: 0.10.0
libtpu: 0.0.40
codegen_flags: <defaults>
</compile_context>

<pallas_src>
import math

import jax
import jax.numpy as jnp
from jax.experimental import pallas as pl
from jax.experimental.pallas import tpu as pltpu

LANE = 128
SUBLANE = 16          # bf16 sublane packing


def _round_up(x, m):
    return (x + m - 1) // m * m


# ----------------------------------------------------------------------------
# Kernel: one batch tile of Linear -> LReLU -> Linear -> LReLU -> Linear -> Sigmoid
# ----------------------------------------------------------------------------
def discriminator_kernel(x_ref, w1_ref, b1_ref, w2_ref, b2_ref, w3_ref, b3_ref, o_ref):
    x = x_ref[...]                                          # (TB, Din_pad) bf16

    # Layer 1: MXU bf16 x bf16 -> f32 accumulate; bias add in f32.
    h1 = jnp.dot(x, w1_ref[...], preferred_element_type=jnp.float32) + b1_ref[...]
    # LeakyReLU(0.2) as maximum() in bf16 (2 VALU ops on packed vregs; this is also
    # the dtype the next MXU call needs, so no extra cast). On v5e bf16 VALU is
    # emulated but still correct; the maximum() form is cheaper there too.
    h1 = h1.astype(jnp.bfloat16)
    h1 = jnp.maximum(h1, 0.2 * h1)

    # Layer 2
    h2 = jnp.dot(h1, w2_ref[...], preferred_element_type=jnp.float32) + b2_ref[...]
    h2 = h2.astype(jnp.bfloat16)
    h2 = jnp.maximum(h2, 0.2 * h2)

    # Layer 3 (output columns zero-padded to 128 lanes -> lane-dense stores)
    h3 = jnp.dot(h2, w3_ref[...], preferred_element_type=jnp.float32) + b3_ref[...]

    # Exact sigmoid (exp + divide on the EUP); guaranteed to land in [0, 1],
    # unlike approx reciprocal. Store bf16 to halve the output write traffic.
    o_ref[...] = (1.0 / (1.0 + jnp.exp(-h3))).astype(o_ref.dtype)


# ----------------------------------------------------------------------------
# One-time parameter preparation (hoisted out of the forward pass)
# ----------------------------------------------------------------------------
def prepare_params(params, img_shape, output_dim):
    """Pads weights to lane-aligned shapes and casts MXU inputs to bf16 once."""
    w1, b1, w2, b2, w3, b3 = (params[k] for k in ("w1", "b1", "w2", "b2", "w3", "b3"))
    d_in = math.prod(img_shape)
    d_in_pad = _round_up(d_in, LANE)
    out_dim = output_dim
    out_pad = _round_up(out_dim, LANE)

    w1_p = w1 if d_in == d_in_pad else (
        jnp.zeros((d_in_pad, w1.shape[1]), w1.dtype).at[:d_in, :].set(w1))
    w3_p = w3 if out_dim == out_pad else (
        jnp.zeros((w3.shape[0], out_pad), w3.dtype).at[:, :out_dim].set(w3))
    b3_p = b3 if out_dim == out_pad else (
        jnp.zeros((1, out_pad), b3.dtype).at[:, :out_dim].set(b3))

    return dict(
        w1=w1_p.astype(jnp.bfloat16),
        w2=w2.astype(jnp.bfloat16),
        w3=w3_p.astype(jnp.bfloat16),
        b1=b1.astype(jnp.float32),
        b2=b2.astype(jnp.float32),
        b3=b3_p.astype(jnp.float32),
        d_in=d_in, d_in_pad=d_in_pad, out_dim=out_dim, out_pad=out_pad,
    )


# ----------------------------------------------------------------------------
# Tile sizing / VMEM accounting (sized for the smallest generation: v7x, 64 MiB)
# ----------------------------------------------------------------------------
def _weight_vmem_bytes(d_in_pad, out_pad):
    # bf16 weights + f32 biases, counted double-buffered to be conservative.
    return (2 * 2 * (d_in_pad * 512 + 512 * 256 + 256 * out_pad)
            + 2 * 4 * (512 + 256 + out_pad))


def _per_row_vmem_bytes(d_in_pad, out_pad):
    # double-buffered bf16 x tile + double-buffered bf16 out tile + f32 intermediates
    return 2 * 2 * d_in_pad + 2 * 2 * out_pad + 4 * (512 + 256 + out_pad)


def _choose_tb(B, d_in_pad, out_pad):
    budget = max(4 << 20, (48 << 20) - _weight_vmem_bytes(d_in_pad, out_pad))
    tb = min(2048, budget // _per_row_vmem_bytes(d_in_pad, out_pad))
    tb = max(SUBLANE, (tb // SUBLANE) * SUBLANE)
    if B <= tb:
        return min(tb, _round_up(B, SUBLANE))
    if B < 2 * tb:
        # Split into >=2 grid steps so megacore (v7x) has work for both cores.
        return max(SUBLANE, _round_up((B + 1) // 2, SUBLANE))
    return tb


def _vmem_limit_bytes(tb, d_in_pad, out_pad):
    need = (_weight_vmem_bytes(d_in_pad, out_pad)
            + tb * _per_row_vmem_bytes(d_in_pad, out_pad)
            + (8 << 20))                       # headroom for compiler scratch
    return int(min(56 << 20, max(32 << 20, need)))


# ----------------------------------------------------------------------------
# Forward pass
# ----------------------------------------------------------------------------
def discriminator_forward(img, prepped):
    """img: (B, C, H, W) float32 (NCHW, matching PyTorch). Returns (B, OUT) f32."""
    d_in, d_in_pad = prepped["d_in"], prepped["d_in_pad"]
    out_dim, out_pad = prepped["out_dim"], prepped["out_pad"]

    B = img.shape[0]
    x = img.reshape(B, -1)                     # img.view(B, -1)
    assert x.shape[1] == d_in

    TB = _choose_tb(B, d_in_pad, out_pad)
    B_pad = _round_up(B, TB)

    # Cast to bf16 BEFORE padding (single extra pass over x at most); skip the
    # pad entirely when already tile-aligned.
    x_bf = x.astype(jnp.bfloat16)
    if B != B_pad or d_in != d_in_pad:
        x_bf = jnp.zeros((B_pad, d_in_pad), jnp.bfloat16).at[:B, :d_in].set(x_bf)

    grid = (B_pad // TB,)

    def const(a):  # full-array block, constant index -> resident across grid steps
        return pl.BlockSpec(a.shape, lambda b: (0,) * a.ndim)

    out = pl.pallas_call(
        discriminator_kernel,
        out_shape=jax.ShapeDtypeStruct((B_pad, out_pad), jnp.bfloat16),
        grid=grid,
        in_specs=[
            pl.BlockSpec((TB, d_in_pad), lambda b: (b, 0)),   # x tile
            const(prepped["w1"]), const(prepped["b1"]),
            const(prepped["w2"]), const(prepped["b2"]),
            const(prepped["w3"]), const(prepped["b3"]),
        ],
        out_specs=pl.BlockSpec((TB, out_pad), lambda b: (b, 0)),
        compiler_params=pltpu.CompilerParams(
            dimension_semantics=("parallel",),
            vmem_limit_bytes=_vmem_limit_bytes(TB, d_in_pad, out_pad),
        ),
    )(x_bf, prepped["w1"], prepped["b1"], prepped["w2"], prepped["b2"],
      prepped["w3"], prepped["b3"])

    # Slice real rows/cols and cast back to f32 in one pass (padded bf16 buffer
    # is never re-read as f32).
    return out[:B, :out_dim].astype(jnp.float32)


# ----------------------------------------------------------------------------
# Init matching nn.Linear default (uniform(+-1/sqrt(fan_in))); weights stored
# transposed relative to PyTorch: (in, out).
# ----------------------------------------------------------------------------
def init_params(key, img_shape, output_dim):
    d_in = math.prod(img_shape)
    dims = [(d_in, 512), (512, 256), (256, output_dim)]
    params = {}
    for i, (fi, fo) in enumerate(dims, start=1):
        key, kw, kb = jax.random.split(key, 3)
        bound = 1.0 / math.sqrt(fi)
        params[f"w{i}"] = jax.random.uniform(kw, (fi, fo), jnp.float32, -bound, bound)
        params[f"b{i}"] = jax.random.uniform(kb, (1, fo), jnp.float32, -bound, bound)
    return params


if __name__ == "__main__":
    IMG_SHAPE = (1, 16, 16)   # C, H, W -> flatten dim = 256
    OUTPUT_DIM = 1
    BATCH = 2

    key = jax.random.PRNGKey(0)
    key, k_img = jax.random.split(key)
    img = jax.random.normal(k_img, (BATCH, *IMG_SHAPE), dtype=jnp.float32)

    params = init_params(key, IMG_SHAPE, OUTPUT_DIM)
    prepped = prepare_params(params, IMG_SHAPE, OUTPUT_DIM)   # one-time bf16/pad

    out = discriminator_forward(img, prepped)
    out = jax.block_until_ready(out)

    # Pure-JAX f32 reference (same math). bf16 MXU inputs / bf16 LeakyReLU /
    # bf16 output inside the kernel -> loosened tolerance.
    xr = img.reshape(BATCH, -1)
    h = xr @ params["w1"] + params["b1"]
    h = jnp.where(h > 0, h, 0.2 * h)
    h = h @ params["w2"] + params["b2"]
    h = jnp.where(h > 0, h, 0.2 * h)
    ref = jax.nn.sigmoid(h @ params["w3"] + params["b3"])

    assert out.shape == (BATCH, OUTPUT_DIM)
    assert bool(jnp.all((out >= 0.0) & (out <= 1.0)))        # exact sigmoid stays in [0,1]
    assert jnp.allclose(out, ref, atol=2e-2, rtol=2e-2), (out, ref)

    print("KERNEL_OK")
</pallas_src>

<mosaic_0001>
module attributes {stable_mosaic.version = 11 : i64} {
  func.func @discriminator_kernel(%arg0: i32, %arg1: memref<16x256xbf16, #tpu.memory_space<vmem>>, %arg2: memref<256x512xbf16, #tpu.memory_space<vmem>>, %arg3: memref<1x512xf32, #tpu.memory_space<vmem>>, %arg4: memref<512x256xbf16, #tpu.memory_space<vmem>>, %arg5: memref<1x256xf32, #tpu.memory_space<vmem>>, %arg6: memref<256x128xbf16, #tpu.memory_space<vmem>>, %arg7: memref<1x128xf32, #tpu.memory_space<vmem>>, %arg8: memref<16x128xbf16, #tpu.memory_space<vmem>>) attributes {dimension_semantics = [#tpu.dimension_semantics<parallel>], iteration_bounds = array<i64: 1>, scalar_prefetch = 0 : i64, scratch_operands = 0 : i64, tpu.core_type = #tpu.core_type<tc>, window_params = [{transform_indices = @transform_0, window_bounds = array<i64: 16, 256>}, {pipeline_mode = #tpu.pipeline_mode<synchronous>, transform_indices = @transform_1, window_bounds = array<i64: 256, 512>}, {pipeline_mode = #tpu.pipeline_mode<synchronous>, transform_indices = @transform_2, window_bounds = array<i64: 1, 512>}, {pipeline_mode = #tpu.pipeline_mode<synchronous>, transform_indices = @transform_3, window_bounds = array<i64: 512, 256>}, {pipeline_mode = #tpu.pipeline_mode<synchronous>, transform_indices = @transform_4, window_bounds = array<i64: 1, 256>}, {pipeline_mode = #tpu.pipeline_mode<synchronous>, transform_indices = @transform_5, window_bounds = array<i64: 256, 128>}, {pipeline_mode = #tpu.pipeline_mode<synchronous>, transform_indices = @transform_6, window_bounds = array<i64: 1, 128>}, {transform_indices = @transform_7, window_bounds = array<i64: 16, 128>}]} {
    %c0 = arith.constant 0 : index
    %c0_0 = arith.constant 0 : index
    %0 = vector.load %arg1[%c0, %c0_0] : memref<16x256xbf16, #tpu.memory_space<vmem>>, vector<16x256xbf16>
    %c0_1 = arith.constant 0 : index
    %c0_2 = arith.constant 0 : index
    %1 = vector.load %arg2[%c0_1, %c0_2] : memref<256x512xbf16, #tpu.memory_space<vmem>>, vector<256x512xbf16>
    %cst = arith.constant dense<0.000000e+00> : vector<16x512xf32>
    %2 = tpu.matmul %0, %1, %cst {dimension_numbers = #tpu.dot_dimension_numbers<[1], [0], [0], [1], [0, 0, 1, 1], [], []>} : vector<16x256xbf16>, vector<256x512xbf16>, vector<16x512xf32> -> vector<16x512xf32>
    %c0_3 = arith.constant 0 : index
    %c0_4 = arith.constant 0 : index
    %3 = vector.load %arg3[%c0_3, %c0_4] : memref<1x512xf32, #tpu.memory_space<vmem>>, vector<1x512xf32>
    %4 = vector.broadcast %3 : vector<1x512xf32> to vector<16x512xf32>
    %5 = arith.addf %2, %4 : vector<16x512xf32>
    %6 = arith.truncf %5 : vector<16x512xf32> to vector<16x512xbf16>
    %cst_5 = arith.constant 2.001950e-01 : bf16
    %7 = vector.broadcast %cst_5 : bf16 to vector<16x512xbf16>
    %8 = arith.mulf %7, %6 : vector<16x512xbf16>
    %9 = arith.maximumf %6, %8 : vector<16x512xbf16>
    %c0_6 = arith.constant 0 : index
    %c0_7 = arith.constant 0 : index
    %10 = vector.load %arg4[%c0_6, %c0_7] : memref<512x256xbf16, #tpu.memory_space<vmem>>, vector<512x256xbf16>
    %cst_8 = arith.constant dense<0.000000e+00> : vector<16x256xf32>
    %11 = tpu.matmul %9, %10, %cst_8 {dimension_numbers = #tpu.dot_dimension_numbers<[1], [0], [0], [1], [0, 0, 1, 1], [], []>} : vector<16x512xbf16>, vector<512x256xbf16>, vector<16x256xf32> -> vector<16x256xf32>
    %c0_9 = arith.constant 0 : index
    %c0_10 = arith.constant 0 : index
    %12 = vector.load %arg5[%c0_9, %c0_10] : memref<1x256xf32, #tpu.memory_space<vmem>>, vector<1x256xf32>
    %13 = vector.broadcast %12 : vector<1x256xf32> to vector<16x256xf32>
    %14 = arith.addf %11, %13 : vector<16x256xf32>
    %15 = arith.truncf %14 : vector<16x256xf32> to vector<16x256xbf16>
    %cst_11 = arith.constant 2.001950e-01 : bf16
    %16 = vector.broadcast %cst_11 : bf16 to vector<16x256xbf16>
    %17 = arith.mulf %16, %15 : vector<16x256xbf16>
    %18 = arith.maximumf %15, %17 : vector<16x256xbf16>
    %c0_12 = arith.constant 0 : index
    %c0_13 = arith.constant 0 : index
    %19 = vector.load %arg6[%c0_12, %c0_13] : memref<256x128xbf16, #tpu.memory_space<vmem>>, vector<256x128xbf16>
    %cst_14 = arith.constant dense<0.000000e+00> : vector<16x128xf32>
    %20 = tpu.matmul %18, %19, %cst_14 {dimension_numbers = #tpu.dot_dimension_numbers<[1], [0], [0], [1], [0, 0, 1, 1], [], []>} : vector<16x256xbf16>, vector<256x128xbf16>, vector<16x128xf32> -> vector<16x128xf32>
    %c0_15 = arith.constant 0 : index
    %c0_16 = arith.constant 0 : index
    %21 = vector.load %arg7[%c0_15, %c0_16] : memref<1x128xf32, #tpu.memory_space<vmem>>, vector<1x128xf32>
    %22 = vector.broadcast %21 : vector<1x128xf32> to vector<16x128xf32>
    %23 = arith.addf %20, %22 : vector<16x128xf32>
    %cst_17 = arith.constant 0.000000e+00 : f32
    %24 = vector.broadcast %cst_17 : f32 to vector<16x128xf32>
    %25 = arith.subf %24, %23 : vector<16x128xf32>
    %26 = math.exp %25 : vector<16x128xf32>
    %cst_18 = arith.constant 1.000000e+00 : f32
    %27 = vector.broadcast %cst_18 : f32 to vector<16x128xf32>
    %28 = arith.addf %27, %26 : vector<16x128xf32>
    %cst_19 = arith.constant 1.000000e+00 : f32
    %29 = vector.broadcast %cst_19 : f32 to vector<16x128xf32>
    %30 = arith.divf %29, %28 : vector<16x128xf32>
    %31 = arith.truncf %30 : vector<16x128xf32> to vector<16x128xbf16>
    %c0_20 = arith.constant 0 : index
    %c0_21 = arith.constant 0 : index
    %32 = vector.load %arg8[%c0_20, %c0_21] : memref<16x128xbf16, #tpu.memory_space<vmem>>, vector<16x128xbf16>
    tpu.vector_store %arg8[%c0_20, %c0_21], %31 {strides = array<i32>} : memref<16x128xbf16, #tpu.memory_space<vmem>>, vector<16x128xbf16>,
    return
  }
  func.func @transform_0(%arg0: i32) -> (i32, i32) {
    %c0_i32 = arith.constant 0 : i32
    %c0_i32_0 = arith.constant 0 : i32
    return %arg0, %c0_i32 : i32, i32
  }
  func.func @transform_1(%arg0: i32) -> (i32, i32) {
    %c0_i32 = arith.constant 0 : i32
    %c0_i32_0 = arith.constant 0 : i32
    %c0_i32_1 = arith.constant 0 : i32
    return %c0_i32, %c0_i32_0 : i32, i32
  }
  func.func @transform_2(%arg0: i32) -> (i32, i32) {
    %c0_i32 = arith.constant 0 : i32
    %c0_i32_0 = arith.constant 0 : i32
    %c0_i32_1 = arith.constant 0 : i32
    return %c0_i32, %c0_i32_0 : i32, i32
  }
  func.func @transform_3(%arg0: i32) -> (i32, i32) {
    %c0_i32 = arith.constant 0 : i32
    %c0_i32_0 = arith.constant 0 : i32
    %c0_i32_1 = arith.constant 0 : i32
    return %c0_i32, %c0_i32_0 : i32, i32
  }
  func.func @transform_4(%arg0: i32) -> (i32, i32) {
    %c0_i32 = arith.constant 0 : i32
    %c0_i32_0 = arith.constant 0 : i32
    %c0_i32_1 = arith.constant 0 : i32
    return %c0_i32, %c0_i32_0 : i32, i32
  }
  func.func @transform_5(%arg0: i32) -> (i32, i32) {
    %c0_i32 = arith.constant 0 : i32
    %c0_i32_0 = arith.constant 0 : i32
    %c0_i32_1 = arith.constant 0 : i32
    return %c0_i32, %c0_i32_0 : i32, i32
  }
  func.func @transform_6(%arg0: i32) -> (i32, i32) {
    %c0_i32 = arith.constant 0 : i32
    %c0_i32_0 = arith.constant 0 : i32
    %c0_i32_1 = arith.constant 0 : i32
    return %c0_i32, %c0_i32_0 : i32, i32
  }
  func.func @transform_7(%arg0: i32) -> (i32, i32) {
    %c0_i32 = arith.constant 0 : i32
    %c0_i32_0 = arith.constant 0 : i32
    return %arg0, %c0_i32 : i32, i32
  }
}

</mosaic_0001>

<llo_original>
// kernel: tpu_custom_call.1
$region0: #{tpu_custom_call.1}
  #allocation0 [shape = 'u32[]', space=smem, size = 0x4, offset = 0x4, fixed_abs, tag = 'smem constant byte address 0x4 - core index']
  #allocation1 [shape = 'u32[72,128]{1,0:T(1,128)}', space=vmem, size = 0x9000, scoped, tag = 'internal scratch']
  %s0 = inlined_call_operand.hbm [shape: bf16[16,256], index: 0, kind: input, shape index: {}]
  %s1 = inlined_call_operand.hbm [shape: bf16[256,512], index: 1, kind: input, shape index: {}]
  %s2 = inlined_call_operand.hbm [shape: f32[1,512], index: 2, kind: input, shape index: {}]
  %s3 = inlined_call_operand.hbm [shape: bf16[512,256], index: 3, kind: input, shape index: {}]
  %s4 = inlined_call_operand.vmem [shape: f32[1,256], index: 4, kind: input, shape index: {}]
  %s5 = inlined_call_operand.hbm [shape: bf16[256,128], index: 5, kind: input, shape index: {}]
  %s6 = inlined_call_operand.vmem [shape: f32[1,128], index: 6, kind: input, shape index: {}]
  %s7 = inlined_call_operand.hbm [shape: bf16[16,128], index: 7, kind: output, shape index: {}]
  %s8 = sld [smem:[#allocation0]]
  $region58: #{tpu_custom_call.1} parent=0
    _
  %s10 = ssub.s32 1, %s8
  %s11 = scalar_select 0, %s10, %s8
  $region1: #{tpu_custom_call.1} parent=0
    #allocation2 [shape = 'u8[8192]{0}', space=vmem, size = 0x2000, scoped, tag = 'input window, operand 0, single buffered']
    #allocation3 [shape = 's32[1]{0}', space=sflag, size = 0x4, scoped, tag = 'scoped memory for tpu_custom_call.1']
    #allocation4 [shape = 's32[1]{0}', space=sflag, size = 0x4, scoped, tag = 'scoped memory for tpu_custom_call.1']
    #allocation5 [shape = 'u8[262144]{0}', space=vmem, size = 0x40000, scoped, tag = 'input window, operand 1, single buffered']
    #allocation6 [shape = 's32[1]{0}', space=sflag, size = 0x4, scoped, tag = 'scoped memory for tpu_custom_call.1']
    #allocation7 [shape = 'u8[2048]{0}', space=vmem, size = 0x800, scoped, tag = 'input window, operand 2, single buffered']
    #allocation8 [shape = 'u8[262144]{0}', space=vmem, size = 0x40000, scoped, tag = 'input window, operand 3, single buffered']
    #allocation9 [shape = 's32[1]{0}', space=sflag, size = 0x4, scoped, tag = 'scoped memory for tpu_custom_call.1']
    #allocation10 [shape = 'u8[65536]{0}', space=vmem, size = 0x10000, scoped, tag = 'input window, operand 5, single buffered']
    #allocation11 [shape = 'u8[4096]{0}', space=vmem, size = 0x1000, scoped, tag = 'output window, operand 0, single buffered']
    %12 = vsyncpa [#allocation3], 0
    %13 = vsyncpa [#allocation6], 0
    %14 = vsyncpa [#allocation9], 0
    %15 = vsyncpa [#allocation4], 0
    // Predicated region
    $region2: #{tpu_custom_call.1} parent=1 // pred_check
      _
    $region3: #{tpu_custom_call.1} parent=1 // pred_check_branch
      %17 = sbr.rel (0) target = $region5
    $region4: #{tpu_custom_call.1} parent=1 // pred_region
      %19 = vsyncadd [#allocation3], 0
      %s20 = sshll.u32 %s0, 4
      %s21 = int_to_ptr.hbm [resolvable:$true] %s20
      %s22 = sshll.u32 [#allocation2], 4
      %s23 = int_to_ptr.vmem [resolvable:$true] %s22
      %28 = dma.hbm_to_vmem [thread:$0]  %s21, 256, %s23, [#allocation3], 128, 128, 8
    $region5: #{tpu_custom_call.1} parent=1 // pred_fallthru
      _
    // Predicated region
    $region6: #{tpu_custom_call.1} parent=1 // pred_check
      _
    $region7: #{tpu_custom_call.1} parent=1 // pred_check_branch
      %30 = sbr.rel (0) target = $region9
    $region8: #{tpu_custom_call.1} parent=1 // pred_region
      %32 = vsyncadd [#allocation6], 0
      %s33 = sshll.u32 %s1, 4
      %s34 = int_to_ptr.hbm [resolvable:$true] %s33
      %s35 = sshll.u32 [#allocation5], 4
      %s36 = int_to_ptr.vmem [resolvable:$true] %s35
      %41 = dma.hbm_to_vmem [thread:$0]  %s34, 8192, %s36, [#allocation6], 256, 256, 16
    $region9: #{tpu_custom_call.1} parent=1 // pred_fallthru
      _
    // Predicated region
    $region10: #{tpu_custom_call.1} parent=1 // pred_check
      _
    $region11: #{tpu_custom_call.1} parent=1 // pred_check_branch
      %43 = sbr.rel (0) target = $region13
    $region12: #{tpu_custom_call.1} parent=1 // pred_region
      %45 = vsyncadd [#allocation6], 0
      %s47 = sshll.u32 %s2, 4
      %s48 = int_to_ptr.hbm [resolvable:$true] %s47
      %s49 = sshll.u32 [#allocation7], 4
      %s50 = int_to_ptr.vmem [resolvable:$true] %s49
      %52 = dma.hbm_to_vmem [thread:$0]  %s48, 64, %s50, [#allocation6]
    $region13: #{tpu_custom_call.1} parent=1 // pred_fallthru
      _
    // Predicated region
    $region14: #{tpu_custom_call.1} parent=1 // pred_check
      _
    $region15: #{tpu_custom_call.1} parent=1 // pred_check_branch
      %54 = sbr.rel (0) target = $region17
    $region16: #{tpu_custom_call.1} parent=1 // pred_region
      %56 = vsyncadd [#allocation9], 0
      %s57 = sshll.u32 %s3, 4
      %s58 = int_to_ptr.hbm [resolvable:$true] %s57
      %s59 = sshll.u32 [#allocation8], 4
      %s60 = int_to_ptr.vmem [resolvable:$true] %s59
      %65 = dma.hbm_to_vmem [thread:$0]  %s58, 8192, %s60, [#allocation9], 128, 128, 8
    $region17: #{tpu_custom_call.1} parent=1 // pred_fallthru
      _
    // Predicated region
    $region18: #{tpu_custom_call.1} parent=1 // pred_check
      _
    $region19: #{tpu_custom_call.1} parent=1 // pred_check_branch
      %67 = sbr.rel (0) target = $region21
    $region20: #{tpu_custom_call.1} parent=1 // pred_region
      _
    $region21: #{tpu_custom_call.1} parent=1 // pred_fallthru
      _
    // Predicated region
    $region22: #{tpu_custom_call.1} parent=1 // pred_check
      _
    $region23: #{tpu_custom_call.1} parent=1 // pred_check_branch
      %69 = sbr.rel (0) target = $region25
    $region24: #{tpu_custom_call.1} parent=1 // pred_region
      %71 = vsyncadd [#allocation9], 0
      %s72 = sshll.u32 %s5, 4
      %s73 = int_to_ptr.hbm [resolvable:$true] %s72
      %s74 = sshll.u32 [#allocation10], 4
      %s75 = int_to_ptr.vmem [resolvable:$true] %s74
      %80 = dma.hbm_to_vmem [thread:$0]  %s73, 2048, %s75, [#allocation9], 64, 64, 4
    $region25: #{tpu_custom_call.1} parent=1 // pred_fallthru
      _
    // Predicated region
    $region26: #{tpu_custom_call.1} parent=1 // pred_check
      _
    $region27: #{tpu_custom_call.1} parent=1 // pred_check_branch
      %82 = sbr.rel (0) target = $region29
    $region28: #{tpu_custom_call.1} parent=1 // pred_region
      _
    $region29: #{tpu_custom_call.1} parent=1 // pred_fallthru
      _
    // Predicated region
    $region30: #{tpu_custom_call.1} parent=1 // pred_check
      _
    $region31: #{tpu_custom_call.1} parent=1 // pred_check_branch
      %84 = sbr.rel (0) target = $region33
    $region32: #{tpu_custom_call.1} parent=1 // pred_region
      %86 = dma.done [#allocation3], 256
    $region33: #{tpu_custom_call.1} parent=1 // pred_fallthru
      _
    // Predicated region
    $region34: #{tpu_custom_call.1} parent=1 // pred_check
      _
    $region35: #{tpu_custom_call.1} parent=1 // pred_check_branch
      %88 = sbr.rel (0) target = $region37
    $region36: #{tpu_custom_call.1} parent=1 // pred_region
      %90 = dma.done [#allocation6], 8192
    $region37: #{tpu_custom_call.1} parent=1 // pred_fallthru
      _
    // Predicated region
    $region38: #{tpu_custom_call.1} parent=1 // pred_check
      _
    $region39: #{tpu_custom_call.1} parent=1 // pred_check_branch
      %92 = sbr.rel (0) target = $region41
    $region40: #{tpu_custom_call.1} parent=1 // pred_region
      %94 = dma.done [#allocation6], 64
    $region41: #{tpu_custom_call.1} parent=1 // pred_fallthru
      _
    // Predicated region
    $region42: #{tpu_custom_call.1} parent=1 // pred_check
      _
    $region43: #{tpu_custom_call.1} parent=1 // pred_check_branch
      %96 = sbr.rel (0) target = $region45
    $region44: #{tpu_custom_call.1} parent=1 // pred_region
      %98 = dma.done [#allocation9], 8192
    $region45: #{tpu_custom_call.1} parent=1 // pred_fallthru
      _
    // Predicated region
    $region46: #{tpu_custom_call.1} parent=1 // pred_check
      _
    $region47: #{tpu_custom_call.1} parent=1 // pred_check_branch
      %100 = sbr.rel (0) target = $region49
    $region48: #{tpu_custom_call.1} parent=1 // pred_region
      %102 = dma.done [#allocation9], 2048
    $region49: #{tpu_custom_call.1} parent=1 // pred_fallthru
      _
    %v103 = vld [vmem:[#allocation2] sm:$0xff]
    %v104 = vld [vmem:[#allocation2 + $0x8] sm:$0xff]
    %v105 = vld [vmem:[#allocation5] sm:$0xff]
    %v106 = vld [vmem:[#allocation5 + $0x8] sm:$0xff]
    %v107 = vld [vmem:[#allocation5 + $0x10] sm:$0xff]
    %v108 = vld [vmem:[#allocation5 + $0x18] sm:$0xff]
    %v109 = vld [vmem:[#allocation5 + $0x20] sm:$0xff]
    %v110 = vld [vmem:[#allocation5 + $0x28] sm:$0xff]
    %v111 = vld [vmem:[#allocation5 + $0x30] sm:$0xff]
    %v112 = vld [vmem:[#allocation5 + $0x38] sm:$0xff]
    %v113 = vld [vmem:[#allocation5 + $0x40] sm:$0xff]
    %v114 = vld [vmem:[#allocation5 + $0x48] sm:$0xff]
    %v115 = vld [vmem:[#allocation5 + $0x50] sm:$0xff]
    %v116 = vld [vmem:[#allocation5 + $0x58] sm:$0xff]
    %v117 = vld [vmem:[#allocation5 + $0x60] sm:$0xff]
    %v118 = vld [vmem:[#allocation5 + $0x68] sm:$0xff]
    %v119 = vld [vmem:[#allocation5 + $0x70] sm:$0xff]
    %v120 = vld [vmem:[#allocation5 + $0x78] sm:$0xff]
    %v121 = vld [vmem:[#allocation5 + $0x80] sm:$0xff]
    %v122 = vld [vmem:[#allocation5 + $0x88] sm:$0xff]
    %v123 = vld [vmem:[#allocation5 + $0x90] sm:$0xff]
    %v124 = vld [vmem:[#allocation5 + $0x98] sm:$0xff]
    %v125 = vld [vmem:[#allocation5 + $0xa0] sm:$0xff]
    %v126 = vld [vmem:[#allocation5 + $0xa8] sm:$0xff]
    %v127 = vld [vmem:[#allocation5 + $0xb0] sm:$0xff]
    %v128 = vld [vmem:[#allocation5 + $0xb8] sm:$0xff]
    %v129 = vld [vmem:[#allocation5 + $0xc0] sm:$0xff]
    %v130 = vld [vmem:[#allocation5 + $0xc8] sm:$0xff]
    %v131 = vld [vmem:[#allocation5 + $0xd0] sm:$0xff]
    %v132 = vld [vmem:[#allocation5 + $0xd8] sm:$0xff]
    %v133 = vld [vmem:[#allocation5 + $0xe0] sm:$0xff]
    %v134 = vld [vmem:[#allocation5 + $0xe8] sm:$0xff]
    %v135 = vld [vmem:[#allocation5 + $0xf0] sm:$0xff]
    %v136 = vld [vmem:[#allocation5 + $0xf8] sm:$0xff]
    %v137 = vld [vmem:[#allocation5 + $0x100] sm:$0xff]
    %v138 = vld [vmem:[#allocation5 + $0x108] sm:$0xff]
    %v139 = vld [vmem:[#allocation5 + $0x110] sm:$0xff]
    %v140 = vld [vmem:[#allocation5 + $0x118] sm:$0xff]
    %v141 = vld [vmem:[#allocation5 + $0x120] sm:$0xff]
    %v142 = vld [vmem:[#allocation5 + $0x128] sm:$0xff]
    %v143 = vld [vmem:[#allocation5 + $0x130] sm:$0xff]
    %v144 = vld [vmem:[#allocation5 + $0x138] sm:$0xff]
    %v145 = vld [vmem:[#allocation5 + $0x140] sm:$0xff]
    %v146 = vld [vmem:[#allocation5 + $0x148] sm:$0xff]
    %v147 = vld [vmem:[#allocation5 + $0x150] sm:$0xff]
    %v148 = vld [vmem:[#allocation5 + $0x158] sm:$0xff]
    %v149 = vld [vmem:[#allocation5 + $0x160] sm:$0xff]
    %v150 = vld [vmem:[#allocation5 + $0x168] sm:$0xff]
    %v151 = vld [vmem:[#allocation5 + $0x170] sm:$0xff]
    %v152 = vld [vmem:[#allocation5 + $0x178] sm:$0xff]
    %v153 = vld [vmem:[#allocation5 + $0x180] sm:$0xff]
    %v154 = vld [vmem:[#allocation5 + $0x188] sm:$0xff]
    %v155 = vld [vmem:[#allocation5 + $0x190] sm:$0xff]
    %v156 = vld [vmem:[#allocation5 + $0x198] sm:$0xff]
    %v157 = vld [vmem:[#allocation5 + $0x1a0] sm:$0xff]
    %v158 = vld [vmem:[#allocation5 + $0x1a8] sm:$0xff]
    %v159 = vld [vmem:[#allocation5 + $0x1b0] sm:$0xff]
    %v160 = vld [vmem:[#allocation5 + $0x1b8] sm:$0xff]
    %v161 = vld [vmem:[#allocation5 + $0x1c0] sm:$0xff]
    %v162 = vld [vmem:[#allocation5 + $0x1c8] sm:$0xff]
    %v163 = vld [vmem:[#allocation5 + $0x1d0] sm:$0xff]
    %v164 = vld [vmem:[#allocation5 + $0x1d8] sm:$0xff]
    %v165 = vld [vmem:[#allocation5 + $0x1e0] sm:$0xff]
    %v166 = vld [vmem:[#allocation5 + $0x1e8] sm:$0xff]
    %v167 = vld [vmem:[#allocation5 + $0x1f0] sm:$0xff]
    %v168 = vld [vmem:[#allocation5 + $0x1f8] sm:$0xff]
    %v169 = vld [vmem:[#allocation7] sm:$0xf]
    %v171 = vperm.slane %v169, 0
    %v172 = vperm.slane %v169, 1
    %v173 = vperm.slane %v169, 2
    %v174 = vperm.slane %v169, 3
    %v181 = vunpack.c.l.b16 %v103
    %v182 = vunpack.c.h.b16 %v103
    %v183 = vunpack.c.l.b16 %v104
    %v184 = vunpack.c.h.b16 %v104
    %v185 = vpack.c.b16 %v183, %v181
    %v186 = vpack.c.b16 %v184, %v182
    %v253 = vunpack.c.l.b16 %v105
    %v254 = vunpack.c.h.b16 %v105
    %v255 = vunpack.c.l.b16 %v106
    %v256 = vunpack.c.h.b16 %v106
    %v257 = vunpack.c.l.b16 %v107
    %v258 = vunpack.c.h.b16 %v107
    %v259 = vunpack.c.l.b16 %v108
    %v260 = vunpack.c.h.b16 %v108
    %v261 = vunpack.c.l.b16 %v109
    %v262 = vunpack.c.h.b16 %v109
    %v263 = vunpack.c.l.b16 %v110
    %v264 = vunpack.c.h.b16 %v110
    %v265 = vunpack.c.l.b16 %v111
    %v266 = vunpack.c.h.b16 %v111
    %v267 = vunpack.c.l.b16 %v112
    %v268 = vunpack.c.h.b16 %v112
    %v269 = vunpack.c.l.b16 %v113
    %v270 = vunpack.c.h.b16 %v113
    %v271 = vunpack.c.l.b16 %v114
    %v272 = vunpack.c.h.b16 %v114
    %v273 = vunpack.c.l.b16 %v115
    %v274 = vunpack.c.h.b16 %v115
    %v275 = vunpack.c.l.b16 %v116
    %v276 = vunpack.c.h.b16 %v116
    %v277 = vunpack.c.l.b16 %v117
    %v278 = vunpack.c.h.b16 %v117
    %v279 = vunpack.c.l.b16 %v118
    %v280 = vunpack.c.h.b16 %v118
    %v281 = vunpack.c.l.b16 %v119
    %v282 = vunpack.c.h.b16 %v119
    %v283 = vunpack.c.l.b16 %v120
    %v284 = vunpack.c.h.b16 %v120
    %v285 = vunpack.c.l.b16 %v121
    %v286 = vunpack.c.h.b16 %v121
    %v287 = vunpack.c.l.b16 %v122
    %v288 = vunpack.c.h.b16 %v122
    %v289 = vunpack.c.l.b16 %v123
    %v290 = vunpack.c.h.b16 %v123
    %v291 = vunpack.c.l.b16 %v124
    %v292 = vunpack.c.h.b16 %v124
    %v293 = vunpack.c.l.b16 %v125
    %v294 = vunpack.c.h.b16 %v125
    %v295 = vunpack.c.l.b16 %v126
    %v296 = vunpack.c.h.b16 %v126
    %v297 = vunpack.c.l.b16 %v127
    %v298 = vunpack.c.h.b16 %v127
    %v299 = vunpack.c.l.b16 %v128
    %v300 = vunpack.c.h.b16 %v128
    %v301 = vunpack.c.l.b16 %v129
    %v302 = vunpack.c.h.b16 %v129
    %v303 = vunpack.c.l.b16 %v130
    %v304 = vunpack.c.h.b16 %v130
    %v305 = vunpack.c.l.b16 %v131
    %v306 = vunpack.c.h.b16 %v131
    %v307 = vunpack.c.l.b16 %v132
    %v308 = vunpack.c.h.b16 %v132
    %v309 = vunpack.c.l.b16 %v133
    %v310 = vunpack.c.h.b16 %v133
    %v311 = vunpack.c.l.b16 %v134
    %v312 = vunpack.c.h.b16 %v134
    %v313 = vunpack.c.l.b16 %v135
    %v314 = vunpack.c.h.b16 %v135
    %v315 = vunpack.c.l.b16 %v136
    %v316 = vunpack.c.h.b16 %v136
    %v317 = vunpack.c.l.b16 %v137
    %v318 = vunpack.c.h.b16 %v137
    %v319 = vunpack.c.l.b16 %v138
    %v320 = vunpack.c.h.b16 %v138
    %v321 = vunpack.c.l.b16 %v139
    %v322 = vunpack.c.h.b16 %v139
    %v323 = vunpack.c.l.b16 %v140
    %v324 = vunpack.c.h.b16 %v140
    %v325 = vunpack.c.l.b16 %v141
    %v326 = vunpack.c.h.b16 %v141
    %v327 = vunpack.c.l.b16 %v142
    %v328 = vunpack.c.h.b16 %v142
    %v329 = vunpack.c.l.b16 %v143
    %v330 = vunpack.c.h.b16 %v143
    %v331 = vunpack.c.l.b16 %v144
    %v332 = vunpack.c.h.b16 %v144
    %v333 = vunpack.c.l.b16 %v145
    %v334 = vunpack.c.h.b16 %v145
    %v335 = vunpack.c.l.b16 %v146
    %v336 = vunpack.c.h.b16 %v146
    %v337 = vunpack.c.l.b16 %v147
    %v338 = vunpack.c.h.b16 %v147
    %v339 = vunpack.c.l.b16 %v148
    %v340 = vunpack.c.h.b16 %v148
    %v341 = vunpack.c.l.b16 %v149
    %v342 = vunpack.c.h.b16 %v149
    %v343 = vunpack.c.l.b16 %v150
    %v344 = vunpack.c.h.b16 %v150
    %v345 = vunpack.c.l.b16 %v151
    %v346 = vunpack.c.h.b16 %v151
    %v347 = vunpack.c.l.b16 %v152
    %v348 = vunpack.c.h.b16 %v152
    %v349 = vunpack.c.l.b16 %v153
    %v350 = vunpack.c.h.b16 %v153
    %v351 = vunpack.c.l.b16 %v154
    %v352 = vunpack.c.h.b16 %v154
    %v353 = vunpack.c.l.b16 %v155
    %v354 = vunpack.c.h.b16 %v155
    %v355 = vunpack.c.l.b16 %v156
    %v356 = vunpack.c.h.b16 %v156
    %v357 = vunpack.c.l.b16 %v157
    %v358 = vunpack.c.h.b16 %v157
    %v359 = vunpack.c.l.b16 %v158
    %v360 = vunpack.c.h.b16 %v158
    %v361 = vunpack.c.l.b16 %v159
    %v362 = vunpack.c.h.b16 %v159
    %v363 = vunpack.c.l.b16 %v160
    %v364 = vunpack.c.h.b16 %v160
    %v365 = vunpack.c.l.b16 %v161
    %v366 = vunpack.c.h.b16 %v161
    %v367 = vunpack.c.l.b16 %v162
    %v368 = vunpack.c.h.b16 %v162
    %v369 = vunpack.c.l.b16 %v163
    %v370 = vunpack.c.h.b16 %v163
    %v371 = vunpack.c.l.b16 %v164
    %v372 = vunpack.c.h.b16 %v164
    %v373 = vunpack.c.l.b16 %v165
    %v374 = vunpack.c.h.b16 %v165
    %v375 = vunpack.c.l.b16 %v166
    %v376 = vunpack.c.h.b16 %v166
    %v377 = vunpack.c.l.b16 %v167
    %v378 = vunpack.c.h.b16 %v167
    %v379 = vunpack.c.l.b16 %v168
    %v380 = vunpack.c.h.b16 %v168
    %v381 = vpack.c.b16 %v257, %v253
    %v382 = vpack.c.b16 %v258, %v254
    %v383 = vpack.c.b16 %v259, %v255
    %v384 = vpack.c.b16 %v260, %v256
    %v385 = vpack.c.b16 %v265, %v261
    %v386 = vpack.c.b16 %v266, %v262
    %v387 = vpack.c.b16 %v267, %v263
    %v388 = vpack.c.b16 %v268, %v264
    %v389 = vpack.c.b16 %v273, %v269
    %v390 = vpack.c.b16 %v274, %v270
    %v391 = vpack.c.b16 %v275, %v271
    %v392 = vpack.c.b16 %v276, %v272
    %v393 = vpack.c.b16 %v281, %v277
    %v394 = vpack.c.b16 %v282, %v278
    %v395 = vpack.c.b16 %v283, %v279
    %v396 = vpack.c.b16 %v284, %v280
    %v397 = vpack.c.b16 %v289, %v285
    %v398 = vpack.c.b16 %v290, %v286
    %v399 = vpack.c.b16 %v291, %v287
    %v400 = vpack.c.b16 %v292, %v288
    %v401 = vpack.c.b16 %v297, %v293
    %v402 = vpack.c.b16 %v298, %v294
    %v403 = vpack.c.b16 %v299, %v295
    %v404 = vpack.c.b16 %v300, %v296
    %v405 = vpack.c.b16 %v305, %v301
    %v406 = vpack.c.b16 %v306, %v302
    %v407 = vpack.c.b16 %v307, %v303
    %v408 = vpack.c.b16 %v308, %v304
    %v409 = vpack.c.b16 %v313, %v309
    %v410 = vpack.c.b16 %v314, %v310
    %v411 = vpack.c.b16 %v315, %v311
    %v412 = vpack.c.b16 %v316, %v312
    %v413 = vpack.c.b16 %v321, %v317
    %v414 = vpack.c.b16 %v322, %v318
    %v415 = vpack.c.b16 %v323, %v319
    %v416 = vpack.c.b16 %v324, %v320
    %v417 = vpack.c.b16 %v329, %v325
    %v418 = vpack.c.b16 %v330, %v326
    %v419 = vpack.c.b16 %v331, %v327
    %v420 = vpack.c.b16 %v332, %v328
    %v421 = vpack.c.b16 %v337, %v333
    %v422 = vpack.c.b16 %v338, %v334
    %v423 = vpack.c.b16 %v339, %v335
    %v424 = vpack.c.b16 %v340, %v336
    %v425 = vpack.c.b16 %v345, %v341
    %v426 = vpack.c.b16 %v346, %v342
    %v427 = vpack.c.b16 %v347, %v343
    %v428 = vpack.c.b16 %v348, %v344
    %v429 = vpack.c.b16 %v353, %v349
    %v430 = vpack.c.b16 %v354, %v350
    %v431 = vpack.c.b16 %v355, %v351
    %v432 = vpack.c.b16 %v356, %v352
    %v433 = vpack.c.b16 %v361, %v357
    %v434 = vpack.c.b16 %v362, %v358
    %v435 = vpack.c.b16 %v363, %v359
    %v436 = vpack.c.b16 %v364, %v360
    %v437 = vpack.c.b16 %v369, %v365
    %v438 = vpack.c.b16 %v370, %v366
    %v439 = vpack.c.b16 %v371, %v367
    %v440 = vpack.c.b16 %v372, %v368
    %v441 = vpack.c.b16 %v377, %v373
    %v442 = vpack.c.b16 %v378, %v374
    %v443 = vpack.c.b16 %v379, %v375
    %v444 = vpack.c.b16 %v380, %v376
    %509 = vmatpush.bf16.msra.mxu0 %v409
    %510 = vmatpush.bf16.msra.mxu0 %v405
    %511 = vmatpush.bf16.msra.mxu0 %v401
    %512 = vmatpush.bf16.msra.mxu0 %v397
    %513 = vmatpush.bf16.msra.mxu0 %v393
    %514 = vmatpush.bf16.msra.mxu0 %v389
    %515 = vmatpush.bf16.msra.mxu0 %v385
    %516 = vmatpush.bf16.msra.mxu0 %v381
    %517 = vmatmul.bf16.gmra.mxu0 %v185
    %v518 = vpop.f32.mrf.mxu0
    %v519 = vadd.f32 %v171, %v518
    %v520 = vpop.f32.mrf.mxu0
    %v521 = vadd.f32 %v171, %v520
    %522 = vdwg.mxu0
    %523 = vmatpush.bf16.msra.mxu0 %v441
    %524 = vmatpush.bf16.msra.mxu0 %v437
    %525 = vmatpush.bf16.msra.mxu0 %v433
    %526 = vmatpush.bf16.msra.mxu0 %v429
    %527 = vmatpush.bf16.msra.mxu0 %v425
    %528 = vmatpush.bf16.msra.mxu0 %v421
    %529 = vmatpush.bf16.msra.mxu0 %v417
    %530 = vmatpush.bf16.msra.mxu0 %v413
    %531 = vmatmul.bf16.gmra.mxu0 %v186
    %v532 = vpop.f32.mrf.mxu0
    %v533 = vadd.f32 %v519, %v532
    %v534 = vpop.f32.mrf.mxu0
    %v535 = vadd.f32 %v521, %v534
    %536 = vdwg.mxu0
    %537 = vmatpush.bf16.msra.mxu0 %v410
    %538 = vmatpush.bf16.msra.mxu0 %v406
    %539 = vmatpush.bf16.msra.mxu0 %v402
    %540 = vmatpush.bf16.msra.mxu0 %v398
    %541 = vmatpush.bf16.msra.mxu0 %v394
    %542 = vmatpush.bf16.msra.mxu0 %v390
    %543 = vmatpush.bf16.msra.mxu0 %v386
    %544 = vmatpush.bf16.msra.mxu0 %v382
    %545 = vmatmul.bf16.gmra.mxu0 %v185
    %v546 = vpop.f32.mrf.mxu0
    %v547 = vadd.f32 %v172, %v546
    %v548 = vpop.f32.mrf.mxu0
    %v549 = vadd.f32 %v172, %v548
    %550 = vdwg.mxu0
    %551 = vmatpush.bf16.msra.mxu0 %v442
    %552 = vmatpush.bf16.msra.mxu0 %v438
    %553 = vmatpush.bf16.msra.mxu0 %v434
    %554 = vmatpush.bf16.msra.mxu0 %v430
    %555 = vmatpush.bf16.msra.mxu0 %v426
    %556 = vmatpush.bf16.msra.mxu0 %v422
    %557 = vmatpush.bf16.msra.mxu0 %v418
    %558 = vmatpush.bf16.msra.mxu0 %v414
    %559 = vmatmul.bf16.gmra.mxu0 %v186
    %v560 = vpop.f32.mrf.mxu0
    %v561 = vadd.f32 %v547, %v560
    %v562 = vpop.f32.mrf.mxu0
    %v563 = vadd.f32 %v549, %v562
    %564 = vdwg.mxu0
    %565 = vmatpush.bf16.msra.mxu0 %v411
    %566 = vmatpush.bf16.msra.mxu0 %v407
    %567 = vmatpush.bf16.msra.mxu0 %v403
    %568 = vmatpush.bf16.msra.mxu0 %v399
    %569 = vmatpush.bf16.msra.mxu0 %v395
    %570 = vmatpush.bf16.msra.mxu0 %v391
    %571 = vmatpush.bf16.msra.mxu0 %v387
    %572 = vmatpush.bf16.msra.mxu0 %v383
    %573 = vmatmul.bf16.gmra.mxu0 %v185
    %v574 = vpop.f32.mrf.mxu0
    %v575 = vadd.f32 %v173, %v574
    %v576 = vpop.f32.mrf.mxu0
    %v577 = vadd.f32 %v173, %v576
    %578 = vdwg.mxu0
    %579 = vmatpush.bf16.msra.mxu0 %v443
    %580 = vmatpush.bf16.msra.mxu0 %v439
    %581 = vmatpush.bf16.msra.mxu0 %v435
    %582 = vmatpush.bf16.msra.mxu0 %v431
    %583 = vmatpush.bf16.msra.mxu0 %v427
    %584 = vmatpush.bf16.msra.mxu0 %v423
    %585 = vmatpush.bf16.msra.mxu0 %v419
    %586 = vmatpush.bf16.msra.mxu0 %v415
    %587 = vmatmul.bf16.gmra.mxu0 %v186
    %v588 = vpop.f32.mrf.mxu0
    %v589 = vadd.f32 %v575, %v588
    %v590 = vpop.f32.mrf.mxu0
    %v591 = vadd.f32 %v577, %v590
    %592 = vdwg.mxu0
    %593 = vmatpush.bf16.msra.mxu0 %v412
    %594 = vmatpush.bf16.msra.mxu0 %v408
    %595 = vmatpush.bf16.msra.mxu0 %v404
    %596 = vmatpush.bf16.msra.mxu0 %v400
    %597 = vmatpush.bf16.msra.mxu0 %v396
    %598 = vmatpush.bf16.msra.mxu0 %v392
    %599 = vmatpush.bf16.msra.mxu0 %v388
    %600 = vmatpush.bf16.msra.mxu0 %v384
    %601 = vmatmul.bf16.gmra.mxu0 %v185
    %v602 = vpop.f32.mrf.mxu0
    %v603 = vadd.f32 %v174, %v602
    %v604 = vpop.f32.mrf.mxu0
    %v605 = vadd.f32 %v174, %v604
    %606 = vdwg.mxu0
    %607 = vmatpush.bf16.msra.mxu0 %v444
    %608 = vmatpush.bf16.msra.mxu0 %v440
    %609 = vmatpush.bf16.msra.mxu0 %v436
    %610 = vmatpush.bf16.msra.mxu0 %v432
    %611 = vmatpush.bf16.msra.mxu0 %v428
    %612 = vmatpush.bf16.msra.mxu0 %v424
    %613 = vmatpush.bf16.msra.mxu0 %v420
    %614 = vmatpush.bf16.msra.mxu0 %v416
    %615 = vmatmul.bf16.gmra.mxu0 %v186
    %v616 = vpop.f32.mrf.mxu0
    %v617 = vadd.f32 %v603, %v616
    %v618 = vpop.f32.mrf.mxu0
    %v619 = vadd.f32 %v605, %v618
    %620 = vdwg.mxu0
    %v621 = vpack.c.bf16 %v561, %v533
    %v622 = vpack.c.bf16 %v617, %v589
    %v623 = vpack.c.bf16 %v563, %v535
    %v624 = vpack.c.bf16 %v619, %v591
    %v625 = vunpack.c.l.bf16 %v621
    %v626 = vunpack.c.h.bf16 %v621
    %v627 = vunpack.c.l.bf16 %v622
    %v628 = vunpack.c.h.bf16 %v622
    %v629 = vunpack.c.l.bf16 %v623
    %v630 = vunpack.c.h.bf16 %v623
    %v631 = vunpack.c.l.bf16 %v624
    %v632 = vunpack.c.h.bf16 %v624
    %v633 = vmul.f32 %v625, 0.20019531
    %v634 = vmul.f32 %v626, 0.20019531
    %v635 = vmul.f32 %v627, 0.20019531
    %v636 = vmul.f32 %v628, 0.20019531
    %v637 = vmul.f32 %v629, 0.20019531
    %v638 = vmul.f32 %v630, 0.20019531
    %v639 = vmul.f32 %v631, 0.20019531
    %v640 = vmul.f32 %v632, 0.20019531
    %v641 = vpack.c.bf16 %v634, %v633
    %v642 = vpack.c.bf16 %v636, %v635
    %v643 = vpack.c.bf16 %v638, %v637
    %v644 = vpack.c.bf16 %v640, %v639
    %v645 = vunpack.c.l.bf16 %v641
    %v646 = vunpack.c.h.bf16 %v641
    %v647 = vunpack.c.l.bf16 %v642
    %v648 = vunpack.c.h.bf16 %v642
    %v649 = vunpack.c.l.bf16 %v643
    %v650 = vunpack.c.h.bf16 %v643
    %v651 = vunpack.c.l.bf16 %v644
    %v652 = vunpack.c.h.bf16 %v644
    %v653 = vmax.f32 %v625, %v645
    %v654 = vmax.f32 %v626, %v646
    %v655 = vmax.f32 %v627, %v647
    %v656 = vmax.f32 %v628, %v648
    %v657 = vmax.f32 %v629, %v649
    %v658 = vmax.f32 %v630, %v650
    %v659 = vmax.f32 %v631, %v651
    %v660 = vmax.f32 %v632, %v652
    %v661 = vpack.c.bf16 %v657, %v653
    %v662 = vpack.c.bf16 %v658, %v654
    %v663 = vpack.c.bf16 %v659, %v655
    %v664 = vpack.c.bf16 %v660, %v656
    %v665 = vld [vmem:[#allocation8] sm:$0xff]
    %v666 = vld [vmem:[#allocation8 + $0x8] sm:$0xff]
    %v667 = vld [vmem:[#allocation8 + $0x10] sm:$0xff]
    %v668 = vld [vmem:[#allocation8 + $0x18] sm:$0xff]
    %v669 = vld [vmem:[#allocation8 + $0x20] sm:$0xff]
    %v670 = vld [vmem:[#allocation8 + $0x28] sm:$0xff]
    %v671 = vld [vmem:[#allocation8 + $0x30] sm:$0xff]
    %v672 = vld [vmem:[#allocation8 + $0x38] sm:$0xff]
    %v673 = vld [vmem:[#allocation8 + $0x40] sm:$0xff]
    %v674 = vld [vmem:[#allocation8 + $0x48] sm:$0xff]
    %v675 = vld [vmem:[#allocation8 + $0x50] sm:$0xff]
    %v676 = vld [vmem:[#allocation8 + $0x58] sm:$0xff]
    %v677 = vld [vmem:[#allocation8 + $0x60] sm:$0xff]
    %v678 = vld [vmem:[#allocation8 + $0x68] sm:$0xff]
    %v679 = vld [vmem:[#allocation8 + $0x70] sm:$0xff]
    %v680 = vld [vmem:[#allocation8 + $0x78] sm:$0xff]
    %v681 = vld [vmem:[#allocation8 + $0x80] sm:$0xff]
    %v682 = vld [vmem:[#allocation8 + $0x88] sm:$0xff]
    %v683 = vld [vmem:[#allocation8 + $0x90] sm:$0xff]
    %v684 = vld [vmem:[#allocation8 + $0x98] sm:$0xff]
    %v685 = vld [vmem:[#allocation8 + $0xa0] sm:$0xff]
    %v686 = vld [vmem:[#allocation8 + $0xa8] sm:$0xff]
    %v687 = vld [vmem:[#allocation8 + $0xb0] sm:$0xff]
    %v688 = vld [vmem:[#allocation8 + $0xb8] sm:$0xff]
    %v689 = vld [vmem:[#allocation8 + $0xc0] sm:$0xff]
    %v690 = vld [vmem:[#allocation8 + $0xc8] sm:$0xff]
    %v691 = vld [vmem:[#allocation8 + $0xd0] sm:$0xff]
    %v692 = vld [vmem:[#allocation8 + $0xd8] sm:$0xff]
    %v693 = vld [vmem:[#allocation8 + $0xe0] sm:$0xff]
    %v694 = vld [vmem:[#allocation8 + $0xe8] sm:$0xff]
    %v695 = vld [vmem:[#allocation8 + $0xf0] sm:$0xff]
    %v696 = vld [vmem:[#allocation8 + $0xf8] sm:$0xff]
    %v697 = vld [vmem:[#allocation8 + $0x100] sm:$0xff]
    %v698 = vld [vmem:[#allocation8 + $0x108] sm:$0xff]
    %v699 = vld [vmem:[#allocation8 + $0x110] sm:$0xff]
    %v700 = vld [vmem:[#allocation8 + $0x118] sm:$0xff]
    %v701 = vld [vmem:[#allocation8 + $0x120] sm:$0xff]
    %v702 = vld [vmem:[#allocation8 + $0x128] sm:$0xff]
    %v703 = vld [vmem:[#allocation8 + $0x130] sm:$0xff]
    %v704 = vld [vmem:[#allocation8 + $0x138] sm:$0xff]
    %v705 = vld [vmem:[#allocation8 + $0x140] sm:$0xff]
    %v706 = vld [vmem:[#allocation8 + $0x148] sm:$0xff]
    %v707 = vld [vmem:[#allocation8 + $0x150] sm:$0xff]
    %v708 = vld [vmem:[#allocation8 + $0x158] sm:$0xff]
    %v709 = vld [vmem:[#allocation8 + $0x160] sm:$0xff]
    %v710 = vld [vmem:[#allocation8 + $0x168] sm:$0xff]
    %v711 = vld [vmem:[#allocation8 + $0x170] sm:$0xff]
    %v712 = vld [vmem:[#allocation8 + $0x178] sm:$0xff]
    %v713 = vld [vmem:[#allocation8 + $0x180] sm:$0xff]
    %v714 = vld [vmem:[#allocation8 + $0x188] sm:$0xff]
    %v715 = vld [vmem:[#allocation8 + $0x190] sm:$0xff]
    %v716 = vld [vmem:[#allocation8 + $0x198] sm:$0xff]
    %v717 = vld [vmem:[#allocation8 + $0x1a0] sm:$0xff]
    %v718 = vld [vmem:[#allocation8 + $0x1a8] sm:$0xff]
    %v719 = vld [vmem:[#allocation8 + $0x1b0] sm:$0xff]
    %v720 = vld [vmem:[#allocation8 + $0x1b8] sm:$0xff]
    %v721 = vld [vmem:[#allocation8 + $0x1c0] sm:$0xff]
    %v722 = vld [vmem:[#allocation8 + $0x1c8] sm:$0xff]
    %v723 = vld [vmem:[#allocation8 + $0x1d0] sm:$0xff]
    %v724 = vld [vmem:[#allocation8 + $0x1d8] sm:$0xff]
    %v725 = vld [vmem:[#allocation8 + $0x1e0] sm:$0xff]
    %v726 = vld [vmem:[#allocation8 + $0x1e8] sm:$0xff]
    %v727 = vld [vmem:[#allocation8 + $0x1f0] sm:$0xff]
    %v728 = vld [vmem:[#allocation8 + $0x1f8] sm:$0xff]
    %v729 = vld [vmem:[%s4] sm:$0x3]
    %v731 = vperm.slane %v729, 0
    %v732 = vperm.slane %v729, 1
    %v799 = vunpack.c.l.b16 %v665
    %v800 = vunpack.c.h.b16 %v665
    %v801 = vunpack.c.l.b16 %v666
    %v802 = vunpack.c.h.b16 %v666
    %v803 = vunpack.c.l.b16 %v667
    %v804 = vunpack.c.h.b16 %v667
    %v805 = vunpack.c.l.b16 %v668
    %v806 = vunpack.c.h.b16 %v668
    %v807 = vunpack.c.l.b16 %v669
    %v808 = vunpack.c.h.b16 %v669
    %v809 = vunpack.c.l.b16 %v670
    %v810 = vunpack.c.h.b16 %v670
    %v811 = vunpack.c.l.b16 %v671
    %v812 = vunpack.c.h.b16 %v671
    %v813 = vunpack.c.l.b16 %v672
    %v814 = vunpack.c.h.b16 %v672
    %v815 = vunpack.c.l.b16 %v673
    %v816 = vunpack.c.h.b16 %v673
    %v817 = vunpack.c.l.b16 %v674
    %v818 = vunpack.c.h.b16 %v674
    %v819 = vunpack.c.l.b16 %v675
    %v820 = vunpack.c.h.b16 %v675
    %v821 = vunpack.c.l.b16 %v676
    %v822 = vunpack.c.h.b16 %v676
    %v823 = vunpack.c.l.b16 %v677
    %v824 = vunpack.c.h.b16 %v677
    %v825 = vunpack.c.l.b16 %v678
    %v826 = vunpack.c.h.b16 %v678
    %v827 = vunpack.c.l.b16 %v679
    %v828 = vunpack.c.h.b16 %v679
    %v829 = vunpack.c.l.b16 %v680
    %v830 = vunpack.c.h.b16 %v680
    %v831 = vunpack.c.l.b16 %v681
    %v832 = vunpack.c.h.b16 %v681
    %v833 = vunpack.c.l.b16 %v682
    %v834 = vunpack.c.h.b16 %v682
    %v835 = vunpack.c.l.b16 %v683
    %v836 = vunpack.c.h.b16 %v683
    %v837 = vunpack.c.l.b16 %v684
    %v838 = vunpack.c.h.b16 %v684
    %v839 = vunpack.c.l.b16 %v685
    %v840 = vunpack.c.h.b16 %v685
    %v841 = vunpack.c.l.b16 %v686
    %v842 = vunpack.c.h.b16 %v686
    %v843 = vunpack.c.l.b16 %v687
    %v844 = vunpack.c.h.b16 %v687
    %v845 = vunpack.c.l.b16 %v688
    %v846 = vunpack.c.h.b16 %v688
    %v847 = vunpack.c.l.b16 %v689
    %v848 = vunpack.c.h.b16 %v689
    %v849 = vunpack.c.l.b16 %v690
    %v850 = vunpack.c.h.b16 %v690
    %v851 = vunpack.c.l.b16 %v691
    %v852 = vunpack.c.h.b16 %v691
    %v853 = vunpack.c.l.b16 %v692
    %v854 = vunpack.c.h.b16 %v692
    %v855 = vunpack.c.l.b16 %v693
    %v856 = vunpack.c.h.b16 %v693
    %v857 = vunpack.c.l.b16 %v694
    %v858 = vunpack.c.h.b16 %v694
    %v859 = vunpack.c.l.b16 %v695
    %v860 = vunpack.c.h.b16 %v695
    %v861 = vunpack.c.l.b16 %v696
    %v862 = vunpack.c.h.b16 %v696
    %v863 = vunpack.c.l.b16 %v697
    %v864 = vunpack.c.h.b16 %v697
    %v865 = vunpack.c.l.b16 %v698
    %v866 = vunpack.c.h.b16 %v698
    %v867 = vunpack.c.l.b16 %v699
    %v868 = vunpack.c.h.b16 %v699
    %v869 = vunpack.c.l.b16 %v700
    %v870 = vunpack.c.h.b16 %v700
    %v871 = vunpack.c.l.b16 %v701
    %v872 = vunpack.c.h.b16 %v701
    %v873 = vunpack.c.l.b16 %v702
    %v874 = vunpack.c.h.b16 %v702
    %v875 = vunpack.c.l.b16 %v703
    %v876 = vunpack.c.h.b16 %v703
    %v877 = vunpack.c.l.b16 %v704
    %v878 = vunpack.c.h.b16 %v704
    %v879 = vunpack.c.l.b16 %v705
    %v880 = vunpack.c.h.b16 %v705
    %v881 = vunpack.c.l.b16 %v706
    %v882 = vunpack.c.h.b16 %v706
    %v883 = vunpack.c.l.b16 %v707
    %v884 = vunpack.c.h.b16 %v707
    %v885 = vunpack.c.l.b16 %v708
    %v886 = vunpack.c.h.b16 %v708
    %v887 = vunpack.c.l.b16 %v709
    %v888 = vunpack.c.h.b16 %v709
    %v889 = vunpack.c.l.b16 %v710
    %v890 = vunpack.c.h.b16 %v710
    %v891 = vunpack.c.l.b16 %v711
    %v892 = vunpack.c.h.b16 %v711
    %v893 = vunpack.c.l.b16 %v712
    %v894 = vunpack.c.h.b16 %v712
    %v895 = vunpack.c.l.b16 %v713
    %v896 = vunpack.c.h.b16 %v713
    %v897 = vunpack.c.l.b16 %v714
    %v898 = vunpack.c.h.b16 %v714
    %v899 = vunpack.c.l.b16 %v715
    %v900 = vunpack.c.h.b16 %v715
    %v901 = vunpack.c.l.b16 %v716
    %v902 = vunpack.c.h.b16 %v716
    %v903 = vunpack.c.l.b16 %v717
    %v904 = vunpack.c.h.b16 %v717
    %v905 = vunpack.c.l.b16 %v718
    %v906 = vunpack.c.h.b16 %v718
    %v907 = vunpack.c.l.b16 %v719
    %v908 = vunpack.c.h.b16 %v719
    %v909 = vunpack.c.l.b16 %v720
    %v910 = vunpack.c.h.b16 %v720
    %v911 = vunpack.c.l.b16 %v721
    %v912 = vunpack.c.h.b16 %v721
    %v913 = vunpack.c.l.b16 %v722
    %v914 = vunpack.c.h.b16 %v722
    %v915 = vunpack.c.l.b16 %v723
    %v916 = vunpack.c.h.b16 %v723
    %v917 = vunpack.c.l.b16 %v724
    %v918 = vunpack.c.h.b16 %v724
    %v919 = vunpack.c.l.b16 %v725
    %v920 = vunpack.c.h.b16 %v725
    %v921 = vunpack.c.l.b16 %v726
    %v922 = vunpack.c.h.b16 %v726
    %v923 = vunpack.c.l.b16 %v727
    %v924 = vunpack.c.h.b16 %v727
    %v925 = vunpack.c.l.b16 %v728
    %v926 = vunpack.c.h.b16 %v728
    %v927 = vpack.c.b16 %v801, %v799
    %v928 = vpack.c.b16 %v802, %v800
    %v929 = vpack.c.b16 %v805, %v803
    %v930 = vpack.c.b16 %v806, %v804
    %v931 = vpack.c.b16 %v809, %v807
    %v932 = vpack.c.b16 %v810, %v808
    %v933 = vpack.c.b16 %v813, %v811
    %v934 = vpack.c.b16 %v814, %v812
    %v935 = vpack.c.b16 %v817, %v815
    %v936 = vpack.c.b16 %v818, %v816
    %v937 = vpack.c.b16 %v821, %v819
    %v938 = vpack.c.b16 %v822, %v820
    %v939 = vpack.c.b16 %v825, %v823
    %v940 = vpack.c.b16 %v826, %v824
    %v941 = vpack.c.b16 %v829, %v827
    %v942 = vpack.c.b16 %v830, %v828
    %v943 = vpack.c.b16 %v833, %v831
    %v944 = vpack.c.b16 %v834, %v832
    %v945 = vpack.c.b16 %v837, %v835
    %v946 = vpack.c.b16 %v838, %v836
    %v947 = vpack.c.b16 %v841, %v839
    %v948 = vpack.c.b16 %v842, %v840
    %v949 = vpack.c.b16 %v845, %v843
    %v950 = vpack.c.b16 %v846, %v844
    %v951 = vpack.c.b16 %v849, %v847
    %v952 = vpack.c.b16 %v850, %v848
    %v953 = vpack.c.b16 %v853, %v851
    %v954 = vpack.c.b16 %v854, %v852
    %v955 = vpack.c.b16 %v857, %v855
    %v956 = vpack.c.b16 %v858, %v856
    %v957 = vpack.c.b16 %v861, %v859
    %v958 = vpack.c.b16 %v862, %v860
    %v959 = vpack.c.b16 %v865, %v863
    %v960 = vpack.c.b16 %v866, %v864
    %v961 = vpack.c.b16 %v869, %v867
    %v962 = vpack.c.b16 %v870, %v868
    %v963 = vpack.c.b16 %v873, %v871
    %v964 = vpack.c.b16 %v874, %v872
    %v965 = vpack.c.b16 %v877, %v875
    %v966 = vpack.c.b16 %v878, %v876
    %v967 = vpack.c.b16 %v881, %v879
    %v968 = vpack.c.b16 %v882, %v880
    %v969 = vpack.c.b16 %v885, %v883
    %v970 = vpack.c.b16 %v886, %v884
    %v971 = vpack.c.b16 %v889, %v887
    %v972 = vpack.c.b16 %v890, %v888
    %v973 = vpack.c.b16 %v893, %v891
    %v974 = vpack.c.b16 %v894, %v892
    %v975 = vpack.c.b16 %v897, %v895
    %v976 = vpack.c.b16 %v898, %v896
    %v977 = vpack.c.b16 %v901, %v899
    %v978 = vpack.c.b16 %v902, %v900
    %v979 = vpack.c.b16 %v905, %v903
    %v980 = vpack.c.b16 %v906, %v904
    %v981 = vpack.c.b16 %v909, %v907
    %v982 = vpack.c.b16 %v910, %v908
    %v983 = vpack.c.b16 %v913, %v911
    %v984 = vpack.c.b16 %v914, %v912
    %v985 = vpack.c.b16 %v917, %v915
    %v986 = vpack.c.b16 %v918, %v916
    %v987 = vpack.c.b16 %v921, %v919
    %v988 = vpack.c.b16 %v922, %v920
    %v989 = vpack.c.b16 %v925, %v923
    %v990 = vpack.c.b16 %v926, %v924
    %1055 = vmatpush.bf16.msra.mxu0 %v941
    %1056 = vmatpush.bf16.msra.mxu0 %v939
    %1057 = vmatpush.bf16.msra.mxu0 %v937
    %1058 = vmatpush.bf16.msra.mxu0 %v935
    %1059 = vmatpush.bf16.msra.mxu0 %v933
    %1060 = vmatpush.bf16.msra.mxu0 %v931
    %1061 = vmatpush.bf16.msra.mxu0 %v929
    %1062 = vmatpush.bf16.msra.mxu0 %v927
    %1063 = vmatmul.bf16.gmra.mxu0 %v661
    %v1064 = vpop.f32.mrf.mxu0
    %v1065 = vadd.f32 %v731, %v1064
    %v1066 = vpop.f32.mrf.mxu0
    %v1067 = vadd.f32 %v731, %v1066
    %1068 = vdwg.mxu0
    %1069 = vmatpush.bf16.msra.mxu0 %v957
    %1070 = vmatpush.bf16.msra.mxu0 %v955
    %1071 = vmatpush.bf16.msra.mxu0 %v953
    %1072 = vmatpush.bf16.msra.mxu0 %v951
    %1073 = vmatpush.bf16.msra.mxu0 %v949
    %1074 = vmatpush.bf16.msra.mxu0 %v947
    %1075 = vmatpush.bf16.msra.mxu0 %v945
    %1076 = vmatpush.bf16.msra.mxu0 %v943
    %1077 = vmatmul.bf16.gmra.mxu0 %v662
    %v1078 = vpop.f32.mrf.mxu0
    %v1079 = vadd.f32 %v1065, %v1078
    %v1080 = vpop.f32.mrf.mxu0
    %v1081 = vadd.f32 %v1067, %v1080
    %1082 = vdwg.mxu0
    %1083 = vmatpush.bf16.msra.mxu0 %v973
    %1084 = vmatpush.bf16.msra.mxu0 %v971
    %1085 = vmatpush.bf16.msra.mxu0 %v969
    %1086 = vmatpush.bf16.msra.mxu0 %v967
    %1087 = vmatpush.bf16.msra.mxu0 %v965
    %1088 = vmatpush.bf16.msra.mxu0 %v963
    %1089 = vmatpush.bf16.msra.mxu0 %v961
    %1090 = vmatpush.bf16.msra.mxu0 %v959
    %1091 = vmatmul.bf16.gmra.mxu0 %v663
    %v1092 = vpop.f32.mrf.mxu0
    %v1093 = vadd.f32 %v1079, %v1092
    %v1094 = vpop.f32.mrf.mxu0
    %v1095 = vadd.f32 %v1081, %v1094
    %1096 = vdwg.mxu0
    %1097 = vmatpush.bf16.msra.mxu0 %v989
    %1098 = vmatpush.bf16.msra.mxu0 %v987
    %1099 = vmatpush.bf16.msra.mxu0 %v985
    %1100 = vmatpush.bf16.msra.mxu0 %v983
    %1101 = vmatpush.bf16.msra.mxu0 %v981
    %1102 = vmatpush.bf16.msra.mxu0 %v979
    %1103 = vmatpush.bf16.msra.mxu0 %v977
    %1104 = vmatpush.bf16.msra.mxu0 %v975
    %1105 = vmatmul.bf16.gmra.mxu0 %v664
    %v1106 = vpop.f32.mrf.mxu0
    %v1107 = vadd.f32 %v1093, %v1106
    %v1108 = vpop.f32.mrf.mxu0
    %v1109 = vadd.f32 %v1095, %v1108
    %1110 = vdwg.mxu0
    %1111 = vmatpush.bf16.msra.mxu0 %v942
    %1112 = vmatpush.bf16.msra.mxu0 %v940
    %1113 = vmatpush.bf16.msra.mxu0 %v938
    %1114 = vmatpush.bf16.msra.mxu0 %v936
    %1115 = vmatpush.bf16.msra.mxu0 %v934
    %1116 = vmatpush.bf16.msra.mxu0 %v932
    %1117 = vmatpush.bf16.msra.mxu0 %v930
    %1118 = vmatpush.bf16.msra.mxu0 %v928
    %1119 = vmatmul.bf16.gmra.mxu0 %v661
    %v1120 = vpop.f32.mrf.mxu0
    %v1121 = vadd.f32 %v732, %v1120
    %v1122 = vpop.f32.mrf.mxu0
    %v1123 = vadd.f32 %v732, %v1122
    %1124 = vdwg.mxu0
    %1125 = vmatpush.bf16.msra.mxu0 %v958
    %1126 = vmatpush.bf16.msra.mxu0 %v956
    %1127 = vmatpush.bf16.msra.mxu0 %v954
    %1128 = vmatpush.bf16.msra.mxu0 %v952
    %1129 = vmatpush.bf16.msra.mxu0 %v950
    %1130 = vmatpush.bf16.msra.mxu0 %v948
    %1131 = vmatpush.bf16.msra.mxu0 %v946
    %1132 = vmatpush.bf16.msra.mxu0 %v944
    %1133 = vmatmul.bf16.gmra.mxu0 %v662
    %v1134 = vpop.f32.mrf.mxu0
    %v1135 = vadd.f32 %v1121, %v1134
    %v1136 = vpop.f32.mrf.mxu0
    %v1137 = vadd.f32 %v1123, %v1136
    %1138 = vdwg.mxu0
    %1139 = vmatpush.bf16.msra.mxu0 %v974
    %1140 = vmatpush.bf16.msra.mxu0 %v972
    %1141 = vmatpush.bf16.msra.mxu0 %v970
    %1142 = vmatpush.bf16.msra.mxu0 %v968
    %1143 = vmatpush.bf16.msra.mxu0 %v966
    %1144 = vmatpush.bf16.msra.mxu0 %v964
    %1145 = vmatpush.bf16.msra.mxu0 %v962
    %1146 = vmatpush.bf16.msra.mxu0 %v960
    %1147 = vmatmul.bf16.gmra.mxu0 %v663
    %v1148 = vpop.f32.mrf.mxu0
    %v1149 = vadd.f32 %v1135, %v1148
    %v1150 = vpop.f32.mrf.mxu0
    %v1151 = vadd.f32 %v1137, %v1150
    %1152 = vdwg.mxu0
    %1153 = vmatpush.bf16.msra.mxu0 %v990
    %1154 = vmatpush.bf16.msra.mxu0 %v988
    %1155 = vmatpush.bf16.msra.mxu0 %v986
    %1156 = vmatpush.bf16.msra.mxu0 %v984
    %1157 = vmatpush.bf16.msra.mxu0 %v982
    %1158 = vmatpush.bf16.msra.mxu0 %v980
    %1159 = vmatpush.bf16.msra.mxu0 %v978
    %1160 = vmatpush.bf16.msra.mxu0 %v976
    %1161 = vmatmul.bf16.gmra.mxu0 %v664
    %v1162 = vpop.f32.mrf.mxu0
    %v1163 = vadd.f32 %v1149, %v1162
    %v1164 = vpop.f32.mrf.mxu0
    %v1165 = vadd.f32 %v1151, %v1164
    %1166 = vdwg.mxu0
    %v1167 = vpack.c.bf16 %v1163, %v1107
    %v1168 = vpack.c.bf16 %v1165, %v1109
    %v1169 = vunpack.c.l.bf16 %v1167
    %v1170 = vunpack.c.h.bf16 %v1167
    %v1171 = vunpack.c.l.bf16 %v1168
    %v1172 = vunpack.c.h.bf16 %v1168
    %v1173 = vmul.f32 %v1169, 0.20019531
    %v1174 = vmul.f32 %v1170, 0.20019531
    %v1175 = vmul.f32 %v1171, 0.20019531
    %v1176 = vmul.f32 %v1172, 0.20019531
    %v1177 = vpack.c.bf16 %v1174, %v1173
    %v1178 = vpack.c.bf16 %v1176, %v1175
    %v1179 = vunpack.c.l.bf16 %v1177
    %v1180 = vunpack.c.h.bf16 %v1177
    %v1181 = vunpack.c.l.bf16 %v1178
    %v1182 = vunpack.c.h.bf16 %v1178
    %v1183 = vmax.f32 %v1169, %v1179
    %v1184 = vmax.f32 %v1170, %v1180
    %v1185 = vmax.f32 %v1171, %v1181
    %v1186 = vmax.f32 %v1172, %v1182
    %v1187 = vpack.c.bf16 %v1185, %v1183
    %v1188 = vpack.c.bf16 %v1186, %v1184
    %v1189 = vld [vmem:[#allocation10] sm:$0xf]
    %v1190 = vld [vmem:[#allocation10 + $0x4] sm:$0xf]
    %v1191 = vld [vmem:[#allocation10 + $0x8] sm:$0xf]
    %v1192 = vld [vmem:[#allocation10 + $0xc] sm:$0xf]
    %v1193 = vld [vmem:[#allocation10 + $0x10] sm:$0xf]
    %v1194 = vld [vmem:[#allocation10 + $0x14] sm:$0xf]
    %v1195 = vld [vmem:[#allocation10 + $0x18] sm:$0xf]
    %v1196 = vld [vmem:[#allocation10 + $0x1c] sm:$0xf]
    %v1197 = vld [vmem:[#allocation10 + $0x20] sm:$0xf]
    %v1198 = vld [vmem:[#allocation10 + $0x24] sm:$0xf]
    %v1199 = vld [vmem:[#allocation10 + $0x28] sm:$0xf]
    %v1200 = vld [vmem:[#allocation10 + $0x2c] sm:$0xf]
    %v1201 = vld [vmem:[#allocation10 + $0x30] sm:$0xf]
    %v1202 = vld [vmem:[#allocation10 + $0x34] sm:$0xf]
    %v1203 = vld [vmem:[#allocation10 + $0x38] sm:$0xf]
    %v1204 = vld [vmem:[#allocation10 + $0x3c] sm:$0xf]
    %v1205 = vld [vmem:[#allocation10 + $0x40] sm:$0xf]
    %v1206 = vld [vmem:[#allocation10 + $0x44] sm:$0xf]
    %v1207 = vld [vmem:[#allocation10 + $0x48] sm:$0xf]
    %v1208 = vld [vmem:[#allocation10 + $0x4c] sm:$0xf]
    %v1209 = vld [vmem:[#allocation10 + $0x50] sm:$0xf]
    %v1210 = vld [vmem:[#allocation10 + $0x54] sm:$0xf]
    %v1211 = vld [vmem:[#allocation10 + $0x58] sm:$0xf]
    %v1212 = vld [vmem:[#allocation10 + $0x5c] sm:$0xf]
    %v1213 = vld [vmem:[#allocation10 + $0x60] sm:$0xf]
    %v1214 = vld [vmem:[#allocation10 + $0x64] sm:$0xf]
    %v1215 = vld [vmem:[#allocation10 + $0x68] sm:$0xf]
    %v1216 = vld [vmem:[#allocation10 + $0x6c] sm:$0xf]
    %v1217 = vld [vmem:[#allocation10 + $0x70] sm:$0xf]
    %v1218 = vld [vmem:[#allocation10 + $0x74] sm:$0xf]
    %v1219 = vld [vmem:[#allocation10 + $0x78] sm:$0xf]
    %v1220 = vld [vmem:[#allocation10 + $0x7c] sm:$0xf]
    %v1221 = vld [vmem:[%s6] sm:$0x1]
    %v1223 = vperm.slane %v1221, 0
    %v1257 = vunpack.c.l.b16 %v1189
    %v1258 = vunpack.c.l.b16 %v1190
    %v1259 = vunpack.c.l.b16 %v1191
    %v1260 = vunpack.c.l.b16 %v1192
    %v1261 = vunpack.c.l.b16 %v1193
    %v1262 = vunpack.c.l.b16 %v1194
    %v1263 = vunpack.c.l.b16 %v1195
    %v1264 = vunpack.c.l.b16 %v1196
    %v1265 = vunpack.c.l.b16 %v1197
    %v1266 = vunpack.c.l.b16 %v1198
    %v1267 = vunpack.c.l.b16 %v1199
    %v1268 = vunpack.c.l.b16 %v1200
    %v1269 = vunpack.c.l.b16 %v1201
    %v1270 = vunpack.c.l.b16 %v1202
    %v1271 = vunpack.c.l.b16 %v1203
    %v1272 = vunpack.c.l.b16 %v1204
    %v1273 = vunpack.c.l.b16 %v1205
    %v1274 = vunpack.c.l.b16 %v1206
    %v1275 = vunpack.c.l.b16 %v1207
    %v1276 = vunpack.c.l.b16 %v1208
    %v1277 = vunpack.c.l.b16 %v1209
    %v1278 = vunpack.c.l.b16 %v1210
    %v1279 = vunpack.c.l.b16 %v1211
    %v1280 = vunpack.c.l.b16 %v1212
    %v1281 = vunpack.c.l.b16 %v1213
    %v1282 = vunpack.c.l.b16 %v1214
    %v1283 = vunpack.c.l.b16 %v1215
    %v1284 = vunpack.c.l.b16 %v1216
    %v1285 = vunpack.c.l.b16 %v1217
    %v1286 = vunpack.c.l.b16 %v1218
    %v1287 = vunpack.c.l.b16 %v1219
    %v1288 = vunpack.c.l.b16 %v1220
    %v1289 = vpack.c.b16 %v1258, %v1257
    %v1290 = vpack.c.b16 %v1260, %v1259
    %v1291 = vpack.c.b16 %v1262, %v1261
    %v1292 = vpack.c.b16 %v1264, %v1263
    %v1293 = vpack.c.b16 %v1266, %v1265
    %v1294 = vpack.c.b16 %v1268, %v1267
    %v1295 = vpack.c.b16 %v1270, %v1269
    %v1296 = vpack.c.b16 %v1272, %v1271
    %v1297 = vpack.c.b16 %v1274, %v1273
    %v1298 = vpack.c.b16 %v1276, %v1275
    %v1299 = vpack.c.b16 %v1278, %v1277
    %v1300 = vpack.c.b16 %v1280, %v1279
    %v1301 = vpack.c.b16 %v1282, %v1281
    %v1302 = vpack.c.b16 %v1284, %v1283
    %v1303 = vpack.c.b16 %v1286, %v1285
    %v1304 = vpack.c.b16 %v1288, %v1287
    %1321 = vmatpush.bf16.msra.mxu0 %v1296
    %1322 = vmatpush.bf16.msra.mxu0 %v1295
    %1323 = vmatpush.bf16.msra.mxu0 %v1294
    %1324 = vmatpush.bf16.msra.mxu0 %v1293
    %1325 = vmatpush.bf16.msra.mxu0 %v1292
    %1326 = vmatpush.bf16.msra.mxu0 %v1291
    %1327 = vmatpush.bf16.msra.mxu0 %v1290
    %1328 = vmatpush.bf16.msra.mxu0 %v1289
    %1329 = vmatmul.bf16.gmra.mxu0 %v1187
    %v1330 = vpop.f32.mrf.mxu0
    %v1331 = vadd.f32 %v1223, %v1330
    %v1332 = vpop.f32.mrf.mxu0
    %v1333 = vadd.f32 %v1223, %v1332
    %1334 = vdwg.mxu0
    %1335 = vmatpush.bf16.msra.mxu0 %v1304
    %1336 = vmatpush.bf16.msra.mxu0 %v1303
    %1337 = vmatpush.bf16.msra.mxu0 %v1302
    %1338 = vmatpush.bf16.msra.mxu0 %v1301
    %1339 = vmatpush.bf16.msra.mxu0 %v1300
    %1340 = vmatpush.bf16.msra.mxu0 %v1299
    %1341 = vmatpush.bf16.msra.mxu0 %v1298
    %1342 = vmatpush.bf16.msra.mxu0 %v1297
    %1343 = vmatmul.bf16.gmra.mxu0 %v1188
    %v1344 = vpop.f32.mrf.mxu0
    %v1345 = vadd.f32 %v1331, %v1344
    %v1346 = vpop.f32.mrf.mxu0
    %v1347 = vadd.f32 %v1333, %v1346
    %1348 = vdwg.mxu0
    %v1349 = vsub.f32 0.0, %v1345
    %v1350 = vsub.f32 0.0, %v1347
    %v1351 = vmul.f32 %v1349, 1.442695
    %v1352 = vpow.pop %v1351
    %v1353 = vmul.f32 %v1350, 1.442695
    %v1354 = vpow.pop %v1353
    %v1355 = vadd.f32 %v1352, 1.0
    %v1356 = vadd.f32 %v1354, 1.0
    %v1357 = vrcp.pop %v1355
    %v1358 = vmul.f32 %v1355, %v1357
    %v1359 = vsub.f32 1.0, %v1358
    %v1360 = vmul.f32 %v1357, %v1359
    %v1361 = vadd.f32 %v1357, %v1360
    %vm1362 = vweird.f32 %v1355
    %vm1363 = vweird.f32 %v1357
    %vm1364 = vmor %vm1362, %vm1363
    %v1365 = vsel %vm1364, %v1357, %v1361
    %v1366 = vand.u32 2147483647, %v1355
    %vm1367 = vcmp.eq.f32.partialorder %v1366, 8.507059e+37
    %v1368 = vand.u32 %v1355, 2147483648
    %v1369 = vor.u32 1.1754944e-38, %v1368
    %v1370 = vsel %vm1367, %v1369, %v1365
    %v1371 = vmul.f32 1.0, %v1370
    %v1372 = vrcp.pop %v1356
    %v1373 = vmul.f32 %v1356, %v1372
    %v1374 = vsub.f32 1.0, %v1373
    %v1375 = vmul.f32 %v1372, %v1374
    %v1376 = vadd.f32 %v1372, %v1375
    %vm1377 = vweird.f32 %v1356
    %vm1378 = vweird.f32 %v1372
    %vm1379 = vmor %vm1377, %vm1378
    %v1380 = vsel %vm1379, %v1372, %v1376
    %v1381 = vand.u32 2147483647, %v1356
    %vm1382 = vcmp.eq.f32.partialorder %v1381, 8.507059e+37
    %v1383 = vand.u32 %v1356, 2147483648
    %v1384 = vor.u32 1.1754944e-38, %v1383
    %v1385 = vsel %vm1382, %v1384, %v1380
    %v1386 = vmul.f32 1.0, %v1385
    %v1387 = vpack.c.bf16 %v1371, %v1371
    %v1388 = vpack.c.bf16 %v1386, %v1386
    %1389 = vst [vmem:[#allocation11] sm:$0xf] %v1387
    %1390 = vst [vmem:[#allocation11 + $0x4] sm:$0xf] %v1388
    // Predicated region
    $region50: #{tpu_custom_call.1} parent=1 // pred_check
      _
    $region51: #{tpu_custom_call.1} parent=1 // pred_check_branch
      %1392 = sbr.rel (0) target = $region53
    $region52: #{tpu_custom_call.1} parent=1 // pred_region
      %1394 = vsyncadd [#allocation4], 0
      %s1395 = sshll.u32 [#allocation11], 4
      %s1396 = int_to_ptr.vmem [resolvable:$true] %s1395
      %s1397 = sshll.u32 %s7, 4
      %s1398 = int_to_ptr.hbm [resolvable:$true] %s1397
      %1403 = dma.vmem_to_hbm [thread:$0]  %s1396, 128, %s1398, [#allocation4], 64, 64, 4
    $region53: #{tpu_custom_call.1} parent=1 // pred_fallthru
      _
    // Predicated region
    $region54: #{tpu_custom_call.1} parent=1 // pred_check
      _
    $region55: #{tpu_custom_call.1} parent=1 // pred_check_branch
      %1405 = sbr.rel (0) target = $region57
    $region56: #{tpu_custom_call.1} parent=1 // pred_region
      %1407 = dma.done [#allocation4], 128
    $region57: #{tpu_custom_call.1} parent=1 // pred_fallthru
      _
    %1408 = vsyncpa [#allocation3], 1
    %1409 = vsyncpa [#allocation6], 1
    %1410 = vsyncpa [#allocation9], 1
    %1411 = vsyncpa [#allocation4], 1

</llo_original>
